<compile_context>
chip_gen: v7x
topology: tpu7x:2x2x1
jax: 0.10.0
libtpu: 0.0.40
codegen_flags: <defaults>
</compile_context>

<pallas_src>
import functools

import jax
import jax.numpy as jnp
from jax.experimental import pallas as pl
from jax.experimental.pallas import tpu as pltpu


def _round_up(n, m):
    return ((n + m - 1) // m) * m


def _mlp_kernel(num_layers, out_f, act_dtype,
                x_ref, w_in_ref, b_in_ref, w_core_ref, b_core_ref,
                w_head_ref, b_head_ref, out_ref):
    """Fully fused MLP forward for one batch tile."""
    mm_dtype = w_in_ref.dtype          # bf16 on the MXU-cast path, else f32

    # in_layer + tanh (MXU accumulates in f32; bias add in f32 on the VPU).
    z = jnp.dot(x_ref[...], w_in_ref[...],
                preferred_element_type=jnp.float32) + b_in_ref[...]
    h = jnp.tanh(z.astype(act_dtype))

    # core layers + tanh; num_layers is a static Python int -> fully unrolled.
    for i in range(num_layers):
        z = jnp.dot(h.astype(mm_dtype), w_core_ref[i],
                    preferred_element_type=jnp.float32) + b_core_ref[i]
        h = jnp.tanh(z.astype(act_dtype))

    # fused mean + covariance head: one matmul;
    #   lanes [0, out_f)        -> mean (raw linear output)
    #   lanes [out_f, 2*out_f)  -> covariance logits -> softplus
    z = jnp.dot(h.astype(mm_dtype), w_head_ref[...],
                preferred_element_type=jnp.float32) + b_head_ref[...]
    # numerically stable single-branch softplus: max(z,0) + log1p(exp(-|z|))
    sp = jnp.maximum(z, 0.0) + jnp.log1p(jnp.exp(-jnp.abs(z)))
    lane = jax.lax.broadcasted_iota(jnp.int32, z.shape, 1)
    out_ref[...] = jnp.where(lane < out_f, z, sp).astype(out_ref.dtype)


def prepare_params(params, *, matmul_dtype=None):
    """Fuse the mean/cov heads and (optionally) cast matmul operands — done ONCE.

    params: (w_in (in,hid), b_in (1,hid), w_core (L,hid,hid), b_core (L,1,hid),
             w_mean (hid,out), b_mean (1,out), w_cov (hid,out), b_cov (1,out))
    Returns (w_in, b_in, w_core, b_core, w_head (hid,2*out), b_head (1,2*out)).
    Biases stay f32: they are added to the f32 MXU accumulator.
    """
    w_in, b_in, w_core, b_core, w_mean, b_mean, w_cov, b_cov = params
    w_head = jnp.concatenate([w_mean, w_cov], axis=1)
    b_head = jnp.concatenate([b_mean, b_cov], axis=1)
    if matmul_dtype is not None:
        w_in = w_in.astype(matmul_dtype)
        w_core = w_core.astype(matmul_dtype)
        w_head = w_head.astype(matmul_dtype)
    return (w_in, b_in.astype(jnp.float32), w_core, b_core.astype(jnp.float32),
            w_head, b_head.astype(jnp.float32))


def probabilistic_nn_forward(x, prepared, *, tile_b=None, bf16_activations=False):
    """x: (B, IN) -> (mean, covariance), each (B, OUT) float32.

    prepared:         output of prepare_params().
    tile_b:           rows per grid step (default: auto, see below).
    bf16_activations: run tanh / hidden activations in bf16 (use on v6e / v7x only;
                      keep False on v5e whose VPU/EUP have no bf16 path).
    """
    w_in, b_in, w_core, b_core, w_head, b_head = prepared
    B, in_f = x.shape
    hid = w_in.shape[1]
    head_w = w_head.shape[1]
    out_f = head_w // 2
    num_layers = w_core.shape[0]

    mm_dtype = w_in.dtype
    if x.dtype != mm_dtype:
        x = x.astype(mm_dtype)          # halves the x HBM read on the bf16 path
    act_dtype = jnp.bfloat16 if bf16_activations else jnp.float32

    # Batch tiling. Sublane-pack multiple: 8 rows (f32) / 16 rows (bf16).
    #   small batch  -> one tile (grid of 1),
    #   medium batch -> split into >= 2 parallel steps (keeps both v7x TCs busy),
    #   large batch  -> 2048-row tiles (amortizes ~0.35us per-grid-step overhead).
    sub = 16 if mm_dtype == jnp.bfloat16 else 8
    b_al = _round_up(B, sub)
    if tile_b is None:
        if b_al <= 512:
            tile_b = b_al
        elif b_al <= 4096:
            tile_b = _round_up(pl.cdiv(b_al, 2), sub)
        else:
            tile_b = 2048
    assert tile_b % sub == 0, f"tile_b={tile_b} must be a multiple of {sub} for {mm_dtype}"
    Bp = _round_up(B, tile_b)
    if Bp != B:
        x = jnp.pad(x, ((0, Bp - B), (0, 0)))

    kernel = functools.partial(_mlp_kernel, num_layers, out_f, act_dtype)

    grid = (Bp // tile_b,)
    in_specs = [
        pl.BlockSpec((tile_b, in_f), lambda i: (i, 0)),             # x (tiled on batch)
        pl.BlockSpec((in_f, hid), lambda i: (0, 0)),                # w_in   (resident)
        pl.BlockSpec((1, hid), lambda i: (0, 0)),                   # b_in   (resident)
        pl.BlockSpec((num_layers, hid, hid), lambda i: (0, 0, 0)),  # w_core (resident)
        pl.BlockSpec((num_layers, 1, hid), lambda i: (0, 0, 0)),    # b_core (resident)
        pl.BlockSpec((hid, head_w), lambda i: (0, 0)),              # fused head W
        pl.BlockSpec((1, head_w), lambda i: (0, 0)),                # fused head b
    ]
    # Compact [mean | softplus(cov)] output: block spans the full last dim, so the
    # writeback DMA is dense/contiguous in HBM (8x less write traffic than the old
    # 128-lane padded slab at OUT=8).
    out_specs = pl.BlockSpec((tile_b, head_w), lambda i: (i, 0))
    out_shape = jax.ShapeDtypeStruct((Bp, head_w), jnp.float32)

    # Advisory cost estimate so XLA does not treat this tiny kernel as expensive.
    flops = 2 * Bp * (in_f * hid + num_layers * hid * hid + hid * head_w)
    transcendentals = Bp * ((num_layers + 1) * hid + 2 * out_f)
    bytes_accessed = (
        Bp * in_f * x.dtype.itemsize + Bp * head_w * 4
        + w_in.size * w_in.dtype.itemsize
        + w_core.size * w_core.dtype.itemsize
        + w_head.size * w_head.dtype.itemsize
        + (b_in.size + b_core.size + b_head.size) * 4)

    slab = pl.pallas_call(
        kernel,
        out_shape=out_shape,
        grid_spec=pltpu.PrefetchScalarGridSpec(
            num_scalar_prefetch=0,
            grid=grid,
            in_specs=in_specs,
            out_specs=out_specs,
        ),
        compiler_params=pltpu.CompilerParams(
            dimension_semantics=("parallel",),
        ),
        cost_estimate=pl.CostEstimate(
            flops=flops, transcendentals=transcendentals,
            bytes_accessed=bytes_accessed),
        # TODO(synk): if hid / num_layers / tile_b are scaled far up on v7x (64 MiB
        # VMEM), mark the constant-index weight specs pipeline_mode=pl.Buffered(1)
        # and set vmem_limit_bytes; unnecessary headroom at these shapes.
    )(x, w_in, b_in, w_core, b_core, w_head, b_head)

    mean = slab[:B, :out_f]
    cov = slab[:B, out_f:head_w]
    return mean, cov


def init_params(key, in_features, hidden_features, out_features, num_layers):
    """Deterministic synthetic parameters (nn.Linear shapes, stored transposed)."""
    ks = jax.random.split(key, 8)
    scale = 0.1
    w_in = scale * jax.random.normal(ks[0], (in_features, hidden_features), jnp.float32)
    b_in = scale * jax.random.normal(ks[1], (1, hidden_features), jnp.float32)
    w_core = scale * jax.random.normal(
        ks[2], (num_layers, hidden_features, hidden_features), jnp.float32)
    b_core = scale * jax.random.normal(
        ks[3], (num_layers, 1, hidden_features), jnp.float32)
    w_mean = scale * jax.random.normal(ks[4], (hidden_features, out_features), jnp.float32)
    b_mean = scale * jax.random.normal(ks[5], (1, out_features), jnp.float32)
    w_cov = scale * jax.random.normal(ks[6], (hidden_features, out_features), jnp.float32)
    b_cov = scale * jax.random.normal(ks[7], (1, out_features), jnp.float32)
    return (w_in, b_in, w_core, b_core, w_mean, b_mean, w_cov, b_cov)


def reference_forward(x, params):
    """Pure-JAX reference mirroring the PyTorch forward."""
    w_in, b_in, w_core, b_core, w_mean, b_mean, w_cov, b_cov = params
    h = jnp.tanh(x @ w_in + b_in)
    for i in range(w_core.shape[0]):
        h = jnp.tanh(h @ w_core[i] + b_core[i])
    mean = h @ w_mean + b_mean
    cov = jax.nn.softplus(h @ w_cov + b_cov)
    return mean, cov


if __name__ == "__main__":
    # Small config consistent with the module's forward:
    #   IN_FEATURES=16, HIDDEN_FEATURES=32, OUT_FEATURES=8, NUM_LAYERS=2, batch=16
    IN_FEATURES = 16
    HIDDEN_FEATURES = 32
    OUT_FEATURES = 8
    NUM_LAYERS = 2
    BATCH = 16

    key = jax.random.PRNGKey(0)
    kx, kp = jax.random.split(key)
    x = jax.random.normal(kx, (BATCH, IN_FEATURES), jnp.float32)
    params = init_params(kp, IN_FEATURES, HIDDEN_FEATURES, OUT_FEATURES, NUM_LAYERS)
    mean_ref, cov_ref = reference_forward(x, params)

    # 1) f32 end-to-end (default; also the v5e-safe path): strict tolerance.
    prep_f32 = prepare_params(params)
    mean, cov = jax.jit(lambda xx, pp: probabilistic_nn_forward(xx, pp))(x, prep_f32)
    mean = jax.block_until_ready(mean)
    cov = jax.block_until_ready(cov)
    assert mean.shape == (BATCH, OUT_FEATURES) and cov.shape == (BATCH, OUT_FEATURES)
    assert jnp.allclose(mean, mean_ref, atol=1e-5, rtol=1e-5)
    assert jnp.allclose(cov, cov_ref, atol=1e-5, rtol=1e-5)
    assert bool(jnp.all(cov > 0.0))

    # 2) bf16 MXU operands, f32 elementwise math (v5e-style): loose tolerance.
    prep_bf16 = prepare_params(params, matmul_dtype=jnp.bfloat16)
    mean_b, cov_b = jax.jit(lambda xx, pp: probabilistic_nn_forward(xx, pp))(x, prep_bf16)
    mean_b = jax.block_until_ready(mean_b)
    cov_b = jax.block_until_ready(cov_b)
    assert jnp.allclose(mean_b, mean_ref, atol=5e-2, rtol=5e-2)
    assert jnp.allclose(cov_b, cov_ref, atol=5e-2, rtol=5e-2)

    # 3) bf16 MXU operands + bf16 tanh activations (v6e / v7x-style): loose tolerance.
    mean_a, cov_a = jax.jit(
        lambda xx, pp: probabilistic_nn_forward(xx, pp, bf16_activations=True)
    )(x, prep_bf16)
    mean_a = jax.block_until_ready(mean_a)
    cov_a = jax.block_until_ready(cov_a)
    assert jnp.allclose(mean_a, mean_ref, atol=5e-2, rtol=5e-2)
    assert jnp.allclose(cov_a, cov_ref, atol=5e-2, rtol=5e-2)
    assert bool(jnp.all(cov_a > 0.0))

    print("KERNEL_OK")
</pallas_src>

<mosaic_0001>
module attributes {stable_mosaic.version = 11 : i64} {
  func.func @_mlp_kernel(%arg0: i32, %arg1: memref<16x16xf32, #tpu.memory_space<vmem>>, %arg2: memref<16x32xf32, #tpu.memory_space<vmem>>, %arg3: memref<1x32xf32, #tpu.memory_space<vmem>>, %arg4: memref<2x32x32xf32, #tpu.memory_space<vmem>>, %arg5: memref<2x1x32xf32, #tpu.memory_space<vmem>>, %arg6: memref<32x16xf32, #tpu.memory_space<vmem>>, %arg7: memref<1x16xf32, #tpu.memory_space<vmem>>, %arg8: memref<16x16xf32, #tpu.memory_space<vmem>>) attributes {dimension_semantics = [#tpu.dimension_semantics<parallel>], iteration_bounds = array<i64: 1>, scalar_prefetch = 0 : i64, scratch_operands = 0 : i64, tpu.core_type = #tpu.core_type<tc>, window_params = [{transform_indices = @transform_0, window_bounds = array<i64: 16, 16>}, {pipeline_mode = #tpu.pipeline_mode<synchronous>, transform_indices = @transform_1, window_bounds = array<i64: 16, 32>}, {pipeline_mode = #tpu.pipeline_mode<synchronous>, transform_indices = @transform_2, window_bounds = array<i64: 1, 32>}, {pipeline_mode = #tpu.pipeline_mode<synchronous>, transform_indices = @transform_3, window_bounds = array<i64: 2, 32, 32>}, {pipeline_mode = #tpu.pipeline_mode<synchronous>, transform_indices = @transform_4, window_bounds = array<i64: 2, 1, 32>}, {pipeline_mode = #tpu.pipeline_mode<synchronous>, transform_indices = @transform_5, window_bounds = array<i64: 32, 16>}, {pipeline_mode = #tpu.pipeline_mode<synchronous>, transform_indices = @transform_6, window_bounds = array<i64: 1, 16>}, {transform_indices = @transform_7, window_bounds = array<i64: 16, 16>}]} {
    %c0 = arith.constant 0 : index
    %c0_0 = arith.constant 0 : index
    %0 = vector.load %arg1[%c0, %c0_0] : memref<16x16xf32, #tpu.memory_space<vmem>>, vector<16x16xf32>
    %c0_1 = arith.constant 0 : index
    %c0_2 = arith.constant 0 : index
    %1 = vector.load %arg2[%c0_1, %c0_2] : memref<16x32xf32, #tpu.memory_space<vmem>>, vector<16x32xf32>
    %cst = arith.constant dense<0.000000e+00> : vector<16x32xf32>
    %2 = tpu.matmul %0, %1, %cst {dimension_numbers = #tpu.dot_dimension_numbers<[1], [0], [0], [1], [0, 0, 1, 1], [], []>} : vector<16x16xf32>, vector<16x32xf32>, vector<16x32xf32> -> vector<16x32xf32>
    %c0_3 = arith.constant 0 : index
    %c0_4 = arith.constant 0 : index
    %3 = vector.load %arg3[%c0_3, %c0_4] : memref<1x32xf32, #tpu.memory_space<vmem>>, vector<1x32xf32>
    %4 = vector.broadcast %3 : vector<1x32xf32> to vector<16x32xf32>
    %5 = arith.addf %2, %4 : vector<16x32xf32>
    %6 = math.tanh %5 : vector<16x32xf32>
    %c0_5 = arith.constant 0 : index
    %c0_6 = arith.constant 0 : index
    %c0_7 = arith.constant 0 : index
    %7 = vector.load %arg4[%c0_5, %c0_6, %c0_7] : memref<2x32x32xf32, #tpu.memory_space<vmem>>, vector<1x32x32xf32>
    %8 = vector.shape_cast %7 : vector<1x32x32xf32> to vector<32x32xf32>
    %cst_8 = arith.constant dense<0.000000e+00> : vector<16x32xf32>
    %9 = tpu.matmul %6, %8, %cst_8 {dimension_numbers = #tpu.dot_dimension_numbers<[1], [0], [0], [1], [0, 0, 1, 1], [], []>} : vector<16x32xf32>, vector<32x32xf32>, vector<16x32xf32> -> vector<16x32xf32>
    %c0_9 = arith.constant 0 : index
    %c0_10 = arith.constant 0 : index
    %c0_11 = arith.constant 0 : index
    %10 = vector.load %arg5[%c0_9, %c0_10, %c0_11] : memref<2x1x32xf32, #tpu.memory_space<vmem>>, vector<1x1x32xf32>
    %11 = vector.shape_cast %10 : vector<1x1x32xf32> to vector<1x32xf32>
    %12 = vector.broadcast %11 : vector<1x32xf32> to vector<16x32xf32>
    %13 = arith.addf %9, %12 : vector<16x32xf32>
    %14 = math.tanh %13 : vector<16x32xf32>
    %c1 = arith.constant 1 : index
    %c0_12 = arith.constant 0 : index
    %c0_13 = arith.constant 0 : index
    %15 = vector.load %arg4[%c1, %c0_12, %c0_13] : memref<2x32x32xf32, #tpu.memory_space<vmem>>, vector<1x32x32xf32>
    %16 = vector.shape_cast %15 : vector<1x32x32xf32> to vector<32x32xf32>
    %cst_14 = arith.constant dense<0.000000e+00> : vector<16x32xf32>
    %17 = tpu.matmul %14, %16, %cst_14 {dimension_numbers = #tpu.dot_dimension_numbers<[1], [0], [0], [1], [0, 0, 1, 1], [], []>} : vector<16x32xf32>, vector<32x32xf32>, vector<16x32xf32> -> vector<16x32xf32>
    %c1_15 = arith.constant 1 : index
    %c0_16 = arith.constant 0 : index
    %c0_17 = arith.constant 0 : index
    %18 = vector.load %arg5[%c1_15, %c0_16, %c0_17] : memref<2x1x32xf32, #tpu.memory_space<vmem>>, vector<1x1x32xf32>
    %19 = vector.shape_cast %18 : vector<1x1x32xf32> to vector<1x32xf32>
    %20 = vector.broadcast %19 : vector<1x32xf32> to vector<16x32xf32>
    %21 = arith.addf %17, %20 : vector<16x32xf32>
    %22 = math.tanh %21 : vector<16x32xf32>
    %c0_18 = arith.constant 0 : index
    %c0_19 = arith.constant 0 : index
    %23 = vector.load %arg6[%c0_18, %c0_19] : memref<32x16xf32, #tpu.memory_space<vmem>>, vector<32x16xf32>
    %cst_20 = arith.constant dense<0.000000e+00> : vector<16x16xf32>
    %24 = tpu.matmul %22, %23, %cst_20 {dimension_numbers = #tpu.dot_dimension_numbers<[1], [0], [0], [1], [0, 0, 1, 1], [], []>} : vector<16x32xf32>, vector<32x16xf32>, vector<16x16xf32> -> vector<16x16xf32>
    %c0_21 = arith.constant 0 : index
    %c0_22 = arith.constant 0 : index
    %25 = vector.load %arg7[%c0_21, %c0_22] : memref<1x16xf32, #tpu.memory_space<vmem>>, vector<1x16xf32>
    %26 = vector.broadcast %25 : vector<1x16xf32> to vector<16x16xf32>
    %27 = arith.addf %24, %26 : vector<16x16xf32>
    %cst_23 = arith.constant 0.000000e+00 : f32
    %28 = vector.broadcast %cst_23 : f32 to vector<16x16xf32>
    %29 = arith.maximumf %27, %28 : vector<16x16xf32>
    %30 = math.absf %27 : vector<16x16xf32>
    %cst_24 = arith.constant 0.000000e+00 : f32
    %31 = vector.broadcast %cst_24 : f32 to vector<16x16xf32>
    %32 = arith.subf %31, %30 : vector<16x16xf32>
    %33 = math.exp %32 : vector<16x16xf32>
    %34 = math.log1p %33 : vector<16x16xf32>
    %35 = arith.addf %29, %34 : vector<16x16xf32>
    %36 = tpu.iota {dimensions = array<i32: 1>} : vector<16x16xi32>
    %c8_i32 = arith.constant 8 : i32
    %37 = vector.broadcast %c8_i32 : i32 to vector<16x16xi32>
    %38 = arith.cmpi slt, %36, %37 : vector<16x16xi32>
    %39 = arith.select %38, %27, %35 : vector<16x16xi1>, vector<16x16xf32>
    %c0_25 = arith.constant 0 : index
    %c0_26 = arith.constant 0 : index
    %40 = vector.load %arg8[%c0_25, %c0_26] : memref<16x16xf32, #tpu.memory_space<vmem>>, vector<16x16xf32>
    tpu.vector_store %arg8[%c0_25, %c0_26], %39 {strides = array<i32>} : memref<16x16xf32, #tpu.memory_space<vmem>>, vector<16x16xf32>,
    return
  }
  func.func @transform_0(%arg0: i32) -> (i32, i32) {
    %c0_i32 = arith.constant 0 : i32
    %c0_i32_0 = arith.constant 0 : i32
    return %arg0, %c0_i32 : i32, i32
  }
  func.func @transform_1(%arg0: i32) -> (i32, i32) {
    %c0_i32 = arith.constant 0 : i32
    %c0_i32_0 = arith.constant 0 : i32
    %c0_i32_1 = arith.constant 0 : i32
    return %c0_i32, %c0_i32_0 : i32, i32
  }
  func.func @transform_2(%arg0: i32) -> (i32, i32) {
    %c0_i32 = arith.constant 0 : i32
    %c0_i32_0 = arith.constant 0 : i32
    %c0_i32_1 = arith.constant 0 : i32
    return %c0_i32, %c0_i32_0 : i32, i32
  }
  func.func @transform_3(%arg0: i32) -> (i32, i32, i32) {
    %c0_i32 = arith.constant 0 : i32
    %c0_i32_0 = arith.constant 0 : i32
    %c0_i32_1 = arith.constant 0 : i32
    %c0_i32_2 = arith.constant 0 : i32
    return %c0_i32, %c0_i32_0, %c0_i32_1 : i32, i32, i32
  }
  func.func @transform_4(%arg0: i32) -> (i32, i32, i32) {
    %c0_i32 = arith.constant 0 : i32
    %c0_i32_0 = arith.constant 0 : i32
    %c0_i32_1 = arith.constant 0 : i32
    %c0_i32_2 = arith.constant 0 : i32
    return %c0_i32, %c0_i32_0, %c0_i32_1 : i32, i32, i32
  }
  func.func @transform_5(%arg0: i32) -> (i32, i32) {
    %c0_i32 = arith.constant 0 : i32
    %c0_i32_0 = arith.constant 0 : i32
    %c0_i32_1 = arith.constant 0 : i32
    return %c0_i32, %c0_i32_0 : i32, i32
  }
  func.func @transform_6(%arg0: i32) -> (i32, i32) {
    %c0_i32 = arith.constant 0 : i32
    %c0_i32_0 = arith.constant 0 : i32
    %c0_i32_1 = arith.constant 0 : i32
    return %c0_i32, %c0_i32_0 : i32, i32
  }
  func.func @transform_7(%arg0: i32) -> (i32, i32) {
    %c0_i32 = arith.constant 0 : i32
    %c0_i32_0 = arith.constant 0 : i32
    return %arg0, %c0_i32 : i32, i32
  }
}

</mosaic_0001>

<llo_original>
// kernel: _lambda_.1
$region0: #{_lambda_.1}
  #allocation0 [shape = 'u32[]', space=smem, size = 0x4, offset = 0x4, fixed_abs, tag = 'smem constant byte address 0x4 - core index']
  #allocation1 [shape = 'u32[144,128]{1,0:T(1,128)}', space=vmem, size = 0x12000, scoped, tag = 'internal scratch']
  %s0 = inlined_call_operand.vmem [shape: f32[16,16], index: 0, kind: input, shape index: {}]
  %s1 = inlined_call_operand.vmem [shape: f32[16,32], index: 1, kind: input, shape index: {}]
  %s2 = inlined_call_operand.vmem [shape: f32[1,32], index: 2, kind: input, shape index: {}]
  %s3 = inlined_call_operand.hbm [shape: f32[2,32,32], index: 3, kind: input, shape index: {}]
  %s4 = inlined_call_operand.vmem [shape: f32[2,1,32], index: 4, kind: input, shape index: {}]
  %s5 = inlined_call_operand.vmem [shape: f32[32,16], index: 5, kind: input, shape index: {}]
  %s6 = inlined_call_operand.vmem [shape: f32[1,16], index: 6, kind: input, shape index: {}]
  %s7 = inlined_call_operand.vmem [shape: f32[16,16], index: 7, kind: output, shape index: {}]
  %s8 = sld [smem:[#allocation0]]
  $region42: #{_lambda_.1} parent=0
    _
  %s10 = ssub.s32 1, %s8
  %s11 = scalar_select 0, %s10, %s8
  $region1: #{_lambda_.1} parent=0
    #allocation2 [shape = 'u8[32768]{0}', space=vmem, size = 0x8000, scoped, tag = 'input window, operand 3, single buffered']
    #allocation3 [shape = 's32[1]{0}', space=sflag, size = 0x4, scoped, tag = 'scoped memory for _lambda_.1']
    %12 = vsyncpa [#allocation3], 0
    // Predicated region
    $region2: #{_lambda_.1} parent=1 // pred_check
      _
    $region3: #{_lambda_.1} parent=1 // pred_check_branch
      %14 = sbr.rel (0) target = $region5
    $region4: #{_lambda_.1} parent=1 // pred_region
      _
    $region5: #{_lambda_.1} parent=1 // pred_fallthru
      _
    // Predicated region
    $region6: #{_lambda_.1} parent=1 // pred_check
      _
    $region7: #{_lambda_.1} parent=1 // pred_check_branch
      %16 = sbr.rel (0) target = $region9
    $region8: #{_lambda_.1} parent=1 // pred_region
      _
    $region9: #{_lambda_.1} parent=1 // pred_fallthru
      _
    // Predicated region
    $region10: #{_lambda_.1} parent=1 // pred_check
      _
    $region11: #{_lambda_.1} parent=1 // pred_check_branch
      %18 = sbr.rel (0) target = $region13
    $region12: #{_lambda_.1} parent=1 // pred_region
      _
    $region13: #{_lambda_.1} parent=1 // pred_fallthru
      _
    // Predicated region
    $region14: #{_lambda_.1} parent=1 // pred_check
      _
    $region15: #{_lambda_.1} parent=1 // pred_check_branch
      %20 = sbr.rel (0) target = $region17
    $region16: #{_lambda_.1} parent=1 // pred_region
      %s22 = ssub.s32 1024, 1024
      %23 = vsyncadd [#allocation3], %s22
      %s24 = sshll.u32 [#allocation2], 4
      %s25 = int_to_ptr.vmem [resolvable:$true] %s24
      %30 = dma.hbm_to_vmem [thread:$0]  %s3, 1024, %s25, [#allocation3], 128, 128, 8
    $region17: #{_lambda_.1} parent=1 // pred_fallthru
      _
    // Predicated region
    $region18: #{_lambda_.1} parent=1 // pred_check
      _
    $region19: #{_lambda_.1} parent=1 // pred_check_branch
      %32 = sbr.rel (0) target = $region21
    $region20: #{_lambda_.1} parent=1 // pred_region
      _
    $region21: #{_lambda_.1} parent=1 // pred_fallthru
      _
    // Predicated region
    $region22: #{_lambda_.1} parent=1 // pred_check
      _
    $region23: #{_lambda_.1} parent=1 // pred_check_branch
      %34 = sbr.rel (0) target = $region25
    $region24: #{_lambda_.1} parent=1 // pred_region
      _
    $region25: #{_lambda_.1} parent=1 // pred_fallthru
      _
    // Predicated region
    $region26: #{_lambda_.1} parent=1 // pred_check
      _
    $region27: #{_lambda_.1} parent=1 // pred_check_branch
      %36 = sbr.rel (0) target = $region29
    $region28: #{_lambda_.1} parent=1 // pred_region
      _
    $region29: #{_lambda_.1} parent=1 // pred_fallthru
      _
    // Predicated region
    $region30: #{_lambda_.1} parent=1 // pred_check
      _
    $region31: #{_lambda_.1} parent=1 // pred_check_branch
      %38 = sbr.rel (0) target = $region33
    $region32: #{_lambda_.1} parent=1 // pred_region
      %39 = dma.done [#allocation3], 1024
    $region33: #{_lambda_.1} parent=1 // pred_fallthru
      _
    %v40 = vld [vmem:[%s0] sm:$0xff]
    %v41 = vld [vmem:[%s0 + $0x8] sm:$0xff]
    %v42 = vld [vmem:[%s1] sm:$0xff]
    %v43 = vld [vmem:[%s1 + $0x8] sm:$0xff]
    %v44 = vld [vmem:[%s2] sm:$0x1]
    %v46 = vlaneseq
    %v47 = vshrl.u32 %v46, 7
    %v48 = vsub.s32 0, %v47
    %v49 = vrot.slane %v44, %v48
    %vm51 = vcmask 130048
    %v53 = vsel %vm51, %v40, 0
    %v56 = vsel %vm51, %v41, 0
    %58 = vmatprep.subr.mxu0 0.0
    %59 = vmatpush1.msra.mxu0 %v42
    %60 = vmatprep.subr.mxu0 0.0
    %61 = vmatpush1.msra.mxu0 %v43
    %62 = vmatprep.subr.mxu0 0.0
    %63 = vmatpush1.msra.mxu0 0.0
    %64 = vmatprep.subr.mxu0 0.0
    %65 = vmatpush1.msra.mxu0 0.0
    %66 = vmatprep.subr.mxu0 0.0
    %67 = vmatpush1.msra.mxu0 0.0
    %68 = vmatprep.subr.mxu0 0.0
    %69 = vmatpush1.msra.mxu0 0.0
    %70 = vmatprep.subr.mxu0 0.0
    %71 = vmatpush1.msra.mxu0 0.0
    %72 = vmatprep.subr.mxu0 0.0
    %73 = vmatpush1.msra.mxu0 0.0
    %74 = vmatprep.subr.mxu0 0.0
    %75 = vmatpush1.msra.mxu0 0.0
    %76 = vmatprep.subr.mxu0 0.0
    %77 = vmatpush1.msra.mxu0 0.0
    %78 = vmatprep.subr.mxu0 0.0
    %79 = vmatpush1.msra.mxu0 0.0
    %80 = vmatprep.subr.mxu0 0.0
    %81 = vmatpush1.msra.mxu0 0.0
    %82 = vmatprep.subr.mxu0 0.0
    %83 = vmatpush1.msra.mxu0 0.0
    %84 = vmatprep.subr.mxu0 0.0
    %85 = vmatpush1.msra.mxu0 0.0
    %86 = vmatprep.subr.mxu0 0.0
    %87 = vmatpush1.msra.mxu0 0.0
    %88 = vmatprep.subr.mxu0 0.0
    %89 = vmatpush1.msra.mxu0 0.0
    %90 = vmatprep.subr.mxu0 0.0
    %91 = vmatpush1.msra.mxu0 0.0
    %92 = vmatprep.subr.mxu0 0.0
    %93 = vmatpush1.msra.mxu0 0.0
    %94 = vmatprep.subr.mxu0 0.0
    %95 = vmatpush1.msra.mxu0 0.0
    %96 = vmatprep.subr.mxu0 0.0
    %97 = vmatpush1.msra.mxu0 0.0
    %98 = vmatprep.subr.mxu0 0.0
    %99 = vmatpush1.msra.mxu0 0.0
    %100 = vmatprep.subr.mxu0 0.0
    %101 = vmatpush1.msra.mxu0 0.0
    %102 = vmatprep.subr.mxu0 0.0
    %103 = vmatpush1.msra.mxu0 0.0
    %104 = vmatprep.subr.mxu0 0.0
    %105 = vmatpush1.msra.mxu0 0.0
    %106 = vmatprep.subr.mxu0 0.0
    %107 = vmatpush1.msra.mxu0 0.0
    %108 = vmatprep.subr.mxu0 0.0
    %109 = vmatpush1.msra.mxu0 0.0
    %110 = vmatprep.subr.mxu0 0.0
    %111 = vmatpush1.msra.mxu0 0.0
    %112 = vmatprep.subr.mxu0 0.0
    %113 = vmatpush1.msra.mxu0 0.0
    %114 = vmatprep.subr.mxu0 0.0
    %115 = vmatpush1.msra.mxu0 0.0
    %116 = vmatprep.subr.mxu0 0.0
    %117 = vmatpush1.msra.mxu0 0.0
    %118 = vmatprep.subr.mxu0 0.0
    %119 = vmatpush1.msra.mxu0 0.0
    %120 = vmatprep.subr.mxu0 0.0
    %121 = vmatpush1.msra.mxu0 0.0
    %122 = vmatprep.mubr.f32.mxu0 0.0
    %123 = vmatmul.mubr.f32.gmra.mrb[0].mxu0 %v53
    %v124 = vpop.f32.mrb[0].mxu0
    %v125 = vadd.f32 %v49, %v124
    %v126 = vpop.f32.mrb[0].mxu0
    %127 = vmatprep.mubr.f32.mxu0 0.0
    %128 = vmatmul.mubr.f32.gmra.mrb[0].mxu0 %v56
    %v129 = vpop.f32.mrb[0].mxu0
    %v130 = vadd.f32 %v49, %v129
    %v131 = vpop.f32.mrb[0].mxu0
    %132 = vdwg.mxu0
    %v133 = vtanh.pop %v125
    %v134 = vtanh.pop %v130
    %v135 = vld [vmem:[#allocation2] sm:$0xff]
    %v136 = vld [vmem:[#allocation2 + $0x8] sm:$0xff]
    %v137 = vld [vmem:[#allocation2 + $0x10] sm:$0xff]
    %v138 = vld [vmem:[#allocation2 + $0x18] sm:$0xff]
    %v139 = vld [vmem:[%s4] sm:$0x1]
    %v141 = vlaneseq
    %v142 = vshrl.u32 %v141, 7
    %v143 = vsub.s32 0, %v142
    %v144 = vrot.slane %v139, %v143
    %vm146 = vcmask 261120
    %v148 = vsel %vm146, %v133, 0
    %v151 = vsel %vm146, %v134, 0
    %153 = vmatprep.subr.mxu0 0.0
    %154 = vmatpush1.msra.mxu0 %v135
    %155 = vmatprep.subr.mxu0 0.0
    %156 = vmatpush1.msra.mxu0 %v136
    %157 = vmatprep.subr.mxu0 0.0
    %158 = vmatpush1.msra.mxu0 %v137
    %159 = vmatprep.subr.mxu0 0.0
    %160 = vmatpush1.msra.mxu0 %v138
    %161 = vmatprep.subr.mxu0 0.0
    %162 = vmatpush1.msra.mxu0 0.0
    %163 = vmatprep.subr.mxu0 0.0
    %164 = vmatpush1.msra.mxu0 0.0
    %165 = vmatprep.subr.mxu0 0.0
    %166 = vmatpush1.msra.mxu0 0.0
    %167 = vmatprep.subr.mxu0 0.0
    %168 = vmatpush1.msra.mxu0 0.0
    %169 = vmatprep.subr.mxu0 0.0
    %170 = vmatpush1.msra.mxu0 0.0
    %171 = vmatprep.subr.mxu0 0.0
    %172 = vmatpush1.msra.mxu0 0.0
    %173 = vmatprep.subr.mxu0 0.0
    %174 = vmatpush1.msra.mxu0 0.0
    %175 = vmatprep.subr.mxu0 0.0
    %176 = vmatpush1.msra.mxu0 0.0
    %177 = vmatprep.subr.mxu0 0.0
    %178 = vmatpush1.msra.mxu0 0.0
    %179 = vmatprep.subr.mxu0 0.0
    %180 = vmatpush1.msra.mxu0 0.0
    %181 = vmatprep.subr.mxu0 0.0
    %182 = vmatpush1.msra.mxu0 0.0
    %183 = vmatprep.subr.mxu0 0.0
    %184 = vmatpush1.msra.mxu0 0.0
    %185 = vmatprep.subr.mxu0 0.0
    %186 = vmatpush1.msra.mxu0 0.0
    %187 = vmatprep.subr.mxu0 0.0
    %188 = vmatpush1.msra.mxu0 0.0
    %189 = vmatprep.subr.mxu0 0.0
    %190 = vmatpush1.msra.mxu0 0.0
    %191 = vmatprep.subr.mxu0 0.0
    %192 = vmatpush1.msra.mxu0 0.0
    %193 = vmatprep.subr.mxu0 0.0
    %194 = vmatpush1.msra.mxu0 0.0
    %195 = vmatprep.subr.mxu0 0.0
    %196 = vmatpush1.msra.mxu0 0.0
    %197 = vmatprep.subr.mxu0 0.0
    %198 = vmatpush1.msra.mxu0 0.0
    %199 = vmatprep.subr.mxu0 0.0
    %200 = vmatpush1.msra.mxu0 0.0
    %201 = vmatprep.subr.mxu0 0.0
    %202 = vmatpush1.msra.mxu0 0.0
    %203 = vmatprep.subr.mxu0 0.0
    %204 = vmatpush1.msra.mxu0 0.0
    %205 = vmatprep.subr.mxu0 0.0
    %206 = vmatpush1.msra.mxu0 0.0
    %207 = vmatprep.subr.mxu0 0.0
    %208 = vmatpush1.msra.mxu0 0.0
    %209 = vmatprep.subr.mxu0 0.0
    %210 = vmatpush1.msra.mxu0 0.0
    %211 = vmatprep.subr.mxu0 0.0
    %212 = vmatpush1.msra.mxu0 0.0
    %213 = vmatprep.subr.mxu0 0.0
    %214 = vmatpush1.msra.mxu0 0.0
    %215 = vmatprep.subr.mxu0 0.0
    %216 = vmatpush1.msra.mxu0 0.0
    %217 = vmatprep.mubr.f32.mxu0 0.0
    %218 = vmatmul.mubr.f32.gmra.mrb[0].mxu0 %v148
    %v219 = vpop.f32.mrb[0].mxu0
    %v220 = vadd.f32 %v144, %v219
    %v221 = vpop.f32.mrb[0].mxu0
    %222 = vmatprep.mubr.f32.mxu0 0.0
    %223 = vmatmul.mubr.f32.gmra.mrb[0].mxu0 %v151
    %v224 = vpop.f32.mrb[0].mxu0
    %v225 = vadd.f32 %v144, %v224
    %v226 = vpop.f32.mrb[0].mxu0
    %227 = vdwg.mxu0
    %v228 = vtanh.pop %v220
    %v229 = vtanh.pop %v225
    %s230 = scalar_lea.vmem [#allocation2], 32
    %v231 = vld [vmem:[%s230] sm:$0xff]
    %v232 = vld [vmem:[%s230 + $0x8] sm:$0xff]
    %v233 = vld [vmem:[%s230 + $0x10] sm:$0xff]
    %v234 = vld [vmem:[%s230 + $0x18] sm:$0xff]
    %s235 = scalar_lea.vmem %s4, 1
    %v236 = vld [vmem:[%s235] sm:$0x1]
    %v238 = vlaneseq
    %v239 = vshrl.u32 %v238, 7
    %v240 = vsub.s32 0, %v239
    %v241 = vrot.slane %v236, %v240
    %v244 = vsel %vm146, %v228, 0
    %v247 = vsel %vm146, %v229, 0
    %249 = vmatprep.subr.mxu0 0.0
    %250 = vmatpush1.msra.mxu0 %v231
    %251 = vmatprep.subr.mxu0 0.0
    %252 = vmatpush1.msra.mxu0 %v232
    %253 = vmatprep.subr.mxu0 0.0
    %254 = vmatpush1.msra.mxu0 %v233
    %255 = vmatprep.subr.mxu0 0.0
    %256 = vmatpush1.msra.mxu0 %v234
    %257 = vmatprep.subr.mxu0 0.0
    %258 = vmatpush1.msra.mxu0 0.0
    %259 = vmatprep.subr.mxu0 0.0
    %260 = vmatpush1.msra.mxu0 0.0
    %261 = vmatprep.subr.mxu0 0.0
    %262 = vmatpush1.msra.mxu0 0.0
    %263 = vmatprep.subr.mxu0 0.0
    %264 = vmatpush1.msra.mxu0 0.0
    %265 = vmatprep.subr.mxu0 0.0
    %266 = vmatpush1.msra.mxu0 0.0
    %267 = vmatprep.subr.mxu0 0.0
    %268 = vmatpush1.msra.mxu0 0.0
    %269 = vmatprep.subr.mxu0 0.0
    %270 = vmatpush1.msra.mxu0 0.0
    %271 = vmatprep.subr.mxu0 0.0
    %272 = vmatpush1.msra.mxu0 0.0
    %273 = vmatprep.subr.mxu0 0.0
    %274 = vmatpush1.msra.mxu0 0.0
    %275 = vmatprep.subr.mxu0 0.0
    %276 = vmatpush1.msra.mxu0 0.0
    %277 = vmatprep.subr.mxu0 0.0
    %278 = vmatpush1.msra.mxu0 0.0
    %279 = vmatprep.subr.mxu0 0.0
    %280 = vmatpush1.msra.mxu0 0.0
    %281 = vmatprep.subr.mxu0 0.0
    %282 = vmatpush1.msra.mxu0 0.0
    %283 = vmatprep.subr.mxu0 0.0
    %284 = vmatpush1.msra.mxu0 0.0
    %285 = vmatprep.subr.mxu0 0.0
    %286 = vmatpush1.msra.mxu0 0.0
    %287 = vmatprep.subr.mxu0 0.0
    %288 = vmatpush1.msra.mxu0 0.0
    %289 = vmatprep.subr.mxu0 0.0
    %290 = vmatpush1.msra.mxu0 0.0
    %291 = vmatprep.subr.mxu0 0.0
    %292 = vmatpush1.msra.mxu0 0.0
    %293 = vmatprep.subr.mxu0 0.0
    %294 = vmatpush1.msra.mxu0 0.0
    %295 = vmatprep.subr.mxu0 0.0
    %296 = vmatpush1.msra.mxu0 0.0
    %297 = vmatprep.subr.mxu0 0.0
    %298 = vmatpush1.msra.mxu0 0.0
    %299 = vmatprep.subr.mxu0 0.0
    %300 = vmatpush1.msra.mxu0 0.0
    %301 = vmatprep.subr.mxu0 0.0
    %302 = vmatpush1.msra.mxu0 0.0
    %303 = vmatprep.subr.mxu0 0.0
    %304 = vmatpush1.msra.mxu0 0.0
    %305 = vmatprep.subr.mxu0 0.0
    %306 = vmatpush1.msra.mxu0 0.0
    %307 = vmatprep.subr.mxu0 0.0
    %308 = vmatpush1.msra.mxu0 0.0
    %309 = vmatprep.subr.mxu0 0.0
    %310 = vmatpush1.msra.mxu0 0.0
    %311 = vmatprep.subr.mxu0 0.0
    %312 = vmatpush1.msra.mxu0 0.0
    %313 = vmatprep.mubr.f32.mxu0 0.0
    %314 = vmatmul.mubr.f32.gmra.mrb[0].mxu0 %v244
    %v315 = vpop.f32.mrb[0].mxu0
    %v316 = vadd.f32 %v241, %v315
    %v317 = vpop.f32.mrb[0].mxu0
    %318 = vmatprep.mubr.f32.mxu0 0.0
    %319 = vmatmul.mubr.f32.gmra.mrb[0].mxu0 %v247
    %v320 = vpop.f32.mrb[0].mxu0
    %v321 = vadd.f32 %v241, %v320
    %v322 = vpop.f32.mrb[0].mxu0
    %323 = vdwg.mxu0
    %v324 = vtanh.pop %v316
    %v325 = vtanh.pop %v321
    %v326 = vld [vmem:[%s5] sm:$0xff]
    %v327 = vld [vmem:[%s5 + $0x8] sm:$0xff]
    %v328 = vld [vmem:[%s5 + $0x10] sm:$0xff]
    %v329 = vld [vmem:[%s5 + $0x18] sm:$0xff]
    %v330 = vld [vmem:[%s6] sm:$0x1]
    %v332 = vlaneseq
    %v333 = vshrl.u32 %v332, 7
    %v334 = vsub.s32 0, %v333
    %v335 = vrot.slane %v330, %v334
    %v338 = vsel %vm146, %v324, 0
    %v341 = vsel %vm146, %v325, 0
    %343 = vmatprep.subr.mxu0 0.0
    %344 = vmatpush1.msra.mxu0 %v326
    %345 = vmatprep.subr.mxu0 0.0
    %346 = vmatpush1.msra.mxu0 %v327
    %347 = vmatprep.subr.mxu0 0.0
    %348 = vmatpush1.msra.mxu0 %v328
    %349 = vmatprep.subr.mxu0 0.0
    %350 = vmatpush1.msra.mxu0 %v329
    %351 = vmatprep.subr.mxu0 0.0
    %352 = vmatpush1.msra.mxu0 0.0
    %353 = vmatprep.subr.mxu0 0.0
    %354 = vmatpush1.msra.mxu0 0.0
    %355 = vmatprep.subr.mxu0 0.0
    %356 = vmatpush1.msra.mxu0 0.0
    %357 = vmatprep.subr.mxu0 0.0
    %358 = vmatpush1.msra.mxu0 0.0
    %359 = vmatprep.subr.mxu0 0.0
    %360 = vmatpush1.msra.mxu0 0.0
    %361 = vmatprep.subr.mxu0 0.0
    %362 = vmatpush1.msra.mxu0 0.0
    %363 = vmatprep.subr.mxu0 0.0
    %364 = vmatpush1.msra.mxu0 0.0
    %365 = vmatprep.subr.mxu0 0.0
    %366 = vmatpush1.msra.mxu0 0.0
    %367 = vmatprep.subr.mxu0 0.0
    %368 = vmatpush1.msra.mxu0 0.0
    %369 = vmatprep.subr.mxu0 0.0
    %370 = vmatpush1.msra.mxu0 0.0
    %371 = vmatprep.subr.mxu0 0.0
    %372 = vmatpush1.msra.mxu0 0.0
    %373 = vmatprep.subr.mxu0 0.0
    %374 = vmatpush1.msra.mxu0 0.0
    %375 = vmatprep.subr.mxu0 0.0
    %376 = vmatpush1.msra.mxu0 0.0
    %377 = vmatprep.subr.mxu0 0.0
    %378 = vmatpush1.msra.mxu0 0.0
    %379 = vmatprep.subr.mxu0 0.0
    %380 = vmatpush1.msra.mxu0 0.0
    %381 = vmatprep.subr.mxu0 0.0
    %382 = vmatpush1.msra.mxu0 0.0
    %383 = vmatprep.subr.mxu0 0.0
    %384 = vmatpush1.msra.mxu0 0.0
    %385 = vmatprep.subr.mxu0 0.0
    %386 = vmatpush1.msra.mxu0 0.0
    %387 = vmatprep.subr.mxu0 0.0
    %388 = vmatpush1.msra.mxu0 0.0
    %389 = vmatprep.subr.mxu0 0.0
    %390 = vmatpush1.msra.mxu0 0.0
    %391 = vmatprep.subr.mxu0 0.0
    %392 = vmatpush1.msra.mxu0 0.0
    %393 = vmatprep.subr.mxu0 0.0
    %394 = vmatpush1.msra.mxu0 0.0
    %395 = vmatprep.subr.mxu0 0.0
    %396 = vmatpush1.msra.mxu0 0.0
    %397 = vmatprep.subr.mxu0 0.0
    %398 = vmatpush1.msra.mxu0 0.0
    %399 = vmatprep.subr.mxu0 0.0
    %400 = vmatpush1.msra.mxu0 0.0
    %401 = vmatprep.subr.mxu0 0.0
    %402 = vmatpush1.msra.mxu0 0.0
    %403 = vmatprep.subr.mxu0 0.0
    %404 = vmatpush1.msra.mxu0 0.0
    %405 = vmatprep.subr.mxu0 0.0
    %406 = vmatpush1.msra.mxu0 0.0
    %407 = vmatprep.mubr.f32.mxu0 0.0
    %408 = vmatmul.mubr.f32.gmra.mrb[0].mxu0 %v338
    %v409 = vpop.f32.mrb[0].mxu0
    %v410 = vadd.f32 %v335, %v409
    %v411 = vpop.f32.mrb[0].mxu0
    %412 = vmatprep.mubr.f32.mxu0 0.0
    %413 = vmatmul.mubr.f32.gmra.mrb[0].mxu0 %v341
    %v414 = vpop.f32.mrb[0].mxu0
    %v415 = vadd.f32 %v335, %v414
    %v416 = vpop.f32.mrb[0].mxu0
    %417 = vdwg.mxu0
    %v418 = vmax.f32 %v410, 0.0
    %v419 = vmax.f32 %v415, 0.0
    %v420 = vand.u32 2147483647, %v410
    %v421 = vand.u32 2147483647, %v415
    %v422 = vsub.f32 0.0, %v420
    %v423 = vsub.f32 0.0, %v421
    %v424 = vmul.f32 %v422, 1.442695
    %v425 = vpow.pop %v424
    %v426 = vmul.f32 %v423, 1.442695
    %v427 = vpow.pop %v426
    %v428 = vadd.f32 %v425, 1.0
    %v429 = vlog2.pop %v428
    %v430 = vmul.f32 %v429, 0.6931472
    %v431 = vmul.f32 -0.5, %v425
    %v432 = vadd.f32 %v431, 1.0
    %v433 = vmul.f32 %v432, %v425
    %v434 = vand.u32 2147483647, %v425
    %vm435 = vcmp.lt.f32.partialorder %v434, 0.0004427343
    %v436 = vsel %vm435, %v433, %v430
    %v437 = vadd.f32 %v427, 1.0
    %v438 = vlog2.pop %v437
    %v439 = vmul.f32 %v438, 0.6931472
    %v440 = vmul.f32 -0.5, %v427
    %v441 = vadd.f32 %v440, 1.0
    %v442 = vmul.f32 %v441, %v427
    %v443 = vand.u32 2147483647, %v427
    %vm444 = vcmp.lt.f32.partialorder %v443, 0.0004427343
    %v445 = vsel %vm444, %v442, %v439
    %v446 = vadd.f32 %v418, %v436
    %v447 = vadd.f32 %v419, %v445
    %v448 = vlaneseq
    %v449 = vand.u32 %v448, 127
    %vm450 = vcmp.lt.s32.totalorder %v449, 8
    %v451 = vsel %vm450, %v410, %v446
    %v452 = vsel %vm450, %v415, %v447
    %453 = vst.msk [vmem:[%s7] sm:$0xff] %vm51, %v451
    %454 = vst.msk [vmem:[%s7 + $0x8] sm:$0xff] %vm51, %v452
    // Predicated region
    $region34: #{_lambda_.1} parent=1 // pred_check
      _
    $region35: #{_lambda_.1} parent=1 // pred_check_branch
      %456 = sbr.rel (0) target = $region37
    $region36: #{_lambda_.1} parent=1 // pred_region
      _
    $region37: #{_lambda_.1} parent=1 // pred_fallthru
      _
    // Predicated region
    $region38: #{_lambda_.1} parent=1 // pred_check
      _
    $region39: #{_lambda_.1} parent=1 // pred_check_branch
      %458 = sbr.rel (0) target = $region41
    $region40: #{_lambda_.1} parent=1 // pred_region
      _
    $region41: #{_lambda_.1} parent=1 // pred_fallthru
      _
    %459 = vsyncpa [#allocation3], 1

</llo_original>
